<compile_context>
chip_gen: v7x
topology: tpu7x:2x2x1
jax: 0.10.0
libtpu: 0.0.40
codegen_flags: <defaults>
</compile_context>

<pallas_src>
import jax
import jax.numpy as jnp
from jax.experimental import pallas as pl
from jax.experimental.pallas import tpu as pltpu


def _round_up(x, m):
    return ((x + m - 1) // m) * m


# ----------------------------------------------------------------------------
# Pallas kernel: pure broadcast multiply on a (tr, th) tile.
# ----------------------------------------------------------------------------
def _cfe_kernel(xf1_ref, xf2_ref, w1_ref, w2_ref, o1_ref, o2_ref):
    # xf1_ref, xf2_ref : (tr, th) filter tiles
    # w1_ref,  w2_ref  : (tr, 1)  per-row softmax weights (already in dtype)
    o1_ref[...] = xf2_ref[...] * w1_ref[...]
    o2_ref[...] = xf1_ref[...] * w2_ref[...]


# ----------------------------------------------------------------------------
# Wrapper: softmax + layout glue + pallas_call
# ----------------------------------------------------------------------------
def cross_feature_enhancement(x_filter_1, x_filter_2,
                              pool_feature_1, pool_feature_2):
    """All inputs NCHW. pool_feature_* must flatten to C values per batch."""
    B, C, H, W = x_filter_1.shape
    HW = H * W
    rows = B * C
    dtype = x_filter_1.dtype
    itemsize = jnp.dtype(dtype).itemsize

    # --- tiny softmax on the pooled features, computed wrapper-side in f32 ---
    p1 = pool_feature_1.reshape(B, -1)
    p2 = pool_feature_2.reshape(B, -1)
    assert p1.shape[1] == C and p2.shape[1] == C, (
        "pool_feature must flatten to C values per batch element")
    w1 = jax.nn.softmax(p1.astype(jnp.float32), axis=-1).astype(dtype)
    w2 = jax.nn.softmax(p2.astype(jnp.float32), axis=-1).astype(dtype)
    w1 = w1.reshape(rows, 1)
    w2 = w2.reshape(rows, 1)

    # --- flatten filters to a dense 2-D (rows, HW) slab ---
    xf1 = x_filter_1.reshape(rows, HW)
    xf2 = x_filter_2.reshape(rows, HW)

    # --- size-derived tiling: ~1 MiB per operand block, lane/sublane legal ---
    budget = 1 << 20                           # bytes per operand per block
    hw128 = _round_up(HW, 128)
    rows8 = _round_up(rows, 8)
    max_th = max(128, (budget // (8 * itemsize)) // 128 * 128)
    th = min(hw128, max_th)                    # multiple of 128 (or full hw128)
    max_tr = max(8, (budget // (th * itemsize)) // 8 * 8)
    tr = min(rows8, max_tr)                    # multiple of 8 (or full rows8)

    rows_pad = _round_up(rows, tr)
    hw_pad = _round_up(HW, th)

    if rows_pad != rows or hw_pad != HW:
        xf1 = jnp.pad(xf1, ((0, rows_pad - rows), (0, hw_pad - HW)))
        xf2 = jnp.pad(xf2, ((0, rows_pad - rows), (0, hw_pad - HW)))
    if rows_pad != rows:
        w1 = jnp.pad(w1, ((0, rows_pad - rows), (0, 0)))
        w2 = jnp.pad(w2, ((0, rows_pad - rows), (0, 0)))

    grid = (rows_pad // tr, hw_pad // th)

    cost = pl.CostEstimate(
        flops=2 * rows * HW,
        transcendentals=0,
        bytes_accessed=4 * rows * HW * itemsize,
    )

    o1, o2 = pl.pallas_call(
        _cfe_kernel,
        out_shape=(jax.ShapeDtypeStruct((rows_pad, hw_pad), dtype),
                   jax.ShapeDtypeStruct((rows_pad, hw_pad), dtype)),
        grid=grid,
        in_specs=[
            pl.BlockSpec((tr, th), lambda r, h: (r, h)),
            pl.BlockSpec((tr, th), lambda r, h: (r, h)),
            pl.BlockSpec((tr, 1), lambda r, h: (r, 0)),
            pl.BlockSpec((tr, 1), lambda r, h: (r, 0)),
        ],
        out_specs=(
            pl.BlockSpec((tr, th), lambda r, h: (r, h)),
            pl.BlockSpec((tr, th), lambda r, h: (r, h)),
        ),
        compiler_params=pltpu.CompilerParams(
            dimension_semantics=("parallel", "parallel")),
        cost_estimate=cost,
    )(xf1, xf2, w1, w2)

    o1 = o1[:rows, :HW].reshape(B, C, H, W)
    o2 = o2[:rows, :HW].reshape(B, C, H, W)
    return o1, o2


# ----------------------------------------------------------------------------
# Pure-JAX reference (mirrors the PyTorch forward)
# ----------------------------------------------------------------------------
def cross_feature_enhancement_ref(x_filter_1, x_filter_2,
                                  pool_feature_1, pool_feature_2):
    B = pool_feature_1.shape[0]
    w1 = jax.nn.softmax(pool_feature_1.reshape(B, -1), axis=-1)
    w1 = w1.reshape(B, -1, 1, 1)
    w2 = jax.nn.softmax(pool_feature_2.reshape(B, -1), axis=-1)
    w2 = w2.reshape(B, -1, 1, 1)
    return x_filter_2 * w1, x_filter_1 * w2


# ----------------------------------------------------------------------------
if __name__ == "__main__":
    B, C, H, W = 2, 4, 16, 16
    key = jax.random.PRNGKey(0)
    k0, k1, k2, k3 = jax.random.split(key, 4)

    x_filter_1 = jax.random.normal(k0, (B, C, H, W), dtype=jnp.float32)
    x_filter_2 = jax.random.normal(k1, (B, C, H, W), dtype=jnp.float32)
    pool_feature_1 = jax.random.normal(k2, (B, C, 1, 1), dtype=jnp.float32)
    pool_feature_2 = jax.random.normal(k3, (B, C, 1, 1), dtype=jnp.float32)

    out1, out2 = cross_feature_enhancement(
        x_filter_1, x_filter_2, pool_feature_1, pool_feature_2)
    out1 = jax.block_until_ready(out1)
    out2 = jax.block_until_ready(out2)

    ref1, ref2 = cross_feature_enhancement_ref(
        x_filter_1, x_filter_2, pool_feature_1, pool_feature_2)

    assert out1.shape == (B, C, H, W) and out2.shape == (B, C, H, W)
    assert jnp.allclose(out1, ref1, atol=1e-5, rtol=1e-5), (
        float(jnp.max(jnp.abs(out1 - ref1))))
    assert jnp.allclose(out2, ref2, atol=1e-5, rtol=1e-5), (
        float(jnp.max(jnp.abs(out2 - ref2))))

    print("KERNEL_OK")
</pallas_src>

<mosaic_0001>
module attributes {stable_mosaic.version = 11 : i64} {
  func.func @_cfe_kernel(%arg0: i32, %arg1: i32, %arg2: memref<8x256xf32, #tpu.memory_space<vmem>>, %arg3: memref<8x256xf32, #tpu.memory_space<vmem>>, %arg4: memref<8x1xf32, #tpu.memory_space<vmem>>, %arg5: memref<8x1xf32, #tpu.memory_space<vmem>>, %arg6: memref<8x256xf32, #tpu.memory_space<vmem>>, %arg7: memref<8x256xf32, #tpu.memory_space<vmem>>) attributes {dimension_semantics = [#tpu.dimension_semantics<parallel>, #tpu.dimension_semantics<parallel>], iteration_bounds = array<i64: 1, 1>, scalar_prefetch = 0 : i64, scratch_operands = 0 : i64, tpu.core_type = #tpu.core_type<tc>, window_params = [{transform_indices = @transform_0, window_bounds = array<i64: 8, 256>}, {transform_indices = @transform_1, window_bounds = array<i64: 8, 256>}, {transform_indices = @transform_2, window_bounds = array<i64: 8, 1>}, {transform_indices = @transform_3, window_bounds = array<i64: 8, 1>}, {transform_indices = @transform_4, window_bounds = array<i64: 8, 256>}, {transform_indices = @transform_5, window_bounds = array<i64: 8, 256>}]} {
    %c0 = arith.constant 0 : index
    %c0_0 = arith.constant 0 : index
    %0 = vector.load %arg3[%c0, %c0_0] : memref<8x256xf32, #tpu.memory_space<vmem>>, vector<8x256xf32>
    %c0_1 = arith.constant 0 : index
    %c0_2 = arith.constant 0 : index
    %1 = vector.load %arg4[%c0_1, %c0_2] : memref<8x1xf32, #tpu.memory_space<vmem>>, vector<8x1xf32>
    %2 = vector.broadcast %1 : vector<8x1xf32> to vector<8x256xf32>
    %3 = arith.mulf %0, %2 : vector<8x256xf32>
    %c0_3 = arith.constant 0 : index
    %c0_4 = arith.constant 0 : index
    %4 = vector.load %arg6[%c0_3, %c0_4] : memref<8x256xf32, #tpu.memory_space<vmem>>, vector<8x256xf32>
    tpu.vector_store %arg6[%c0_3, %c0_4], %3 {strides = array<i32>} : memref<8x256xf32, #tpu.memory_space<vmem>>, vector<8x256xf32>,
    %c0_5 = arith.constant 0 : index
    %c0_6 = arith.constant 0 : index
    %5 = vector.load %arg2[%c0_5, %c0_6] : memref<8x256xf32, #tpu.memory_space<vmem>>, vector<8x256xf32>
    %c0_7 = arith.constant 0 : index
    %c0_8 = arith.constant 0 : index
    %6 = vector.load %arg5[%c0_7, %c0_8] : memref<8x1xf32, #tpu.memory_space<vmem>>, vector<8x1xf32>
    %7 = vector.broadcast %6 : vector<8x1xf32> to vector<8x256xf32>
    %8 = arith.mulf %5, %7 : vector<8x256xf32>
    %c0_9 = arith.constant 0 : index
    %c0_10 = arith.constant 0 : index
    %9 = vector.load %arg7[%c0_9, %c0_10] : memref<8x256xf32, #tpu.memory_space<vmem>>, vector<8x256xf32>
    tpu.vector_store %arg7[%c0_9, %c0_10], %8 {strides = array<i32>} : memref<8x256xf32, #tpu.memory_space<vmem>>, vector<8x256xf32>,
    return
  }
  func.func @transform_0(%arg0: i32, %arg1: i32) -> (i32, i32) {
    %c0_i32 = arith.constant 0 : i32
    return %arg0, %arg1 : i32, i32
  }
  func.func @transform_1(%arg0: i32, %arg1: i32) -> (i32, i32) {
    %c0_i32 = arith.constant 0 : i32
    return %arg0, %arg1 : i32, i32
  }
  func.func @transform_2(%arg0: i32, %arg1: i32) -> (i32, i32) {
    %c0_i32 = arith.constant 0 : i32
    %c0_i32_0 = arith.constant 0 : i32
    return %arg0, %c0_i32 : i32, i32
  }
  func.func @transform_3(%arg0: i32, %arg1: i32) -> (i32, i32) {
    %c0_i32 = arith.constant 0 : i32
    %c0_i32_0 = arith.constant 0 : i32
    return %arg0, %c0_i32 : i32, i32
  }
  func.func @transform_4(%arg0: i32, %arg1: i32) -> (i32, i32) {
    %c0_i32 = arith.constant 0 : i32
    return %arg0, %arg1 : i32, i32
  }
  func.func @transform_5(%arg0: i32, %arg1: i32) -> (i32, i32) {
    %c0_i32 = arith.constant 0 : i32
    return %arg0, %arg1 : i32, i32
  }
}

</mosaic_0001>

<llo_original>
// kernel: tpu_custom_call.1
$region0: #{tpu_custom_call.1}
  #allocation0 [shape = 'u32[]', space=smem, size = 0x4, offset = 0x4, fixed_abs, tag = 'smem constant byte address 0x4 - core index']
  #allocation1 [shape = 'u32[144,128]{1,0:T(1,128)}', space=vmem, size = 0x12000, scoped, tag = 'internal scratch']
  %s0 = inlined_call_operand.vmem [shape: f32[8,256], index: 0, kind: input, shape index: {}]
  %s1 = inlined_call_operand.hbm [shape: f32[8,256], index: 1, kind: input, shape index: {}]
  %s2 = inlined_call_operand.vmem [shape: f32[8,1], index: 2, kind: input, shape index: {}]
  %s3 = inlined_call_operand.vmem [shape: f32[8,1], index: 3, kind: input, shape index: {}]
  %s4 = inlined_call_operand.hbm [shape: f32[8,256], index: 4, kind: output, shape index: {0}]
  %s5 = inlined_call_operand.hbm [shape: f32[8,256], index: 5, kind: output, shape index: {1}]
  %6 = xla_tuple %s4, %s5
  %s7 = sld [smem:[#allocation0]]
  $region38: #{tpu_custom_call.1} parent=0
    _
  %s9 = ssub.s32 1, %s7
  %s10 = scalar_select 0, %s9, %s7
  $region1: #{tpu_custom_call.1} parent=0
    #allocation2 [shape = 'u8[8192]{0}', space=vmem, size = 0x2000, scoped, tag = 'input window, operand 1, single buffered']
    #allocation3 [shape = 's32[1]{0}', space=sflag, size = 0x4, scoped, tag = 'scoped memory for tpu_custom_call.1']
    #allocation4 [shape = 's32[1]{0}', space=sflag, size = 0x4, scoped, tag = 'scoped memory for tpu_custom_call.1']
    #allocation5 [shape = 'u8[8192]{0}', space=vmem, size = 0x2000, scoped, tag = 'output window, operand 0, single buffered']
    #allocation6 [shape = 'u8[8192]{0}', space=vmem, size = 0x2000, scoped, tag = 'output window, operand 1, single buffered']
    #allocation7 [shape = 's32[1]{0}', space=sflag, size = 0x4, scoped, tag = 'scoped memory for tpu_custom_call.1']
    %11 = vsyncpa [#allocation3], 0
    %12 = vsyncpa [#allocation4], 0
    %13 = vsyncpa [#allocation7], 0
    // Predicated region
    $region2: #{tpu_custom_call.1} parent=1 // pred_check
      _
    $region3: #{tpu_custom_call.1} parent=1 // pred_check_branch
      %15 = sbr.rel (0) target = $region5
    $region4: #{tpu_custom_call.1} parent=1 // pred_region
      _
    $region5: #{tpu_custom_call.1} parent=1 // pred_fallthru
      _
    // Predicated region
    $region6: #{tpu_custom_call.1} parent=1 // pred_check
      _
    $region7: #{tpu_custom_call.1} parent=1 // pred_check_branch
      %17 = sbr.rel (0) target = $region9
    $region8: #{tpu_custom_call.1} parent=1 // pred_region
      %s19 = ssub.s32 256, 256
      %20 = vsyncadd [#allocation3], %s19
      %s22 = sshll.u32 [#allocation2], 4
      %s23 = int_to_ptr.vmem [resolvable:$true] %s22
      %25 = dma.hbm_to_vmem [thread:$0]  %s1, 256, %s23, [#allocation3]
    $region9: #{tpu_custom_call.1} parent=1 // pred_fallthru
      _
    // Predicated region
    $region10: #{tpu_custom_call.1} parent=1 // pred_check
      _
    $region11: #{tpu_custom_call.1} parent=1 // pred_check_branch
      %27 = sbr.rel (0) target = $region13
    $region12: #{tpu_custom_call.1} parent=1 // pred_region
      _
    $region13: #{tpu_custom_call.1} parent=1 // pred_fallthru
      _
    // Predicated region
    $region14: #{tpu_custom_call.1} parent=1 // pred_check
      _
    $region15: #{tpu_custom_call.1} parent=1 // pred_check_branch
      %29 = sbr.rel (0) target = $region17
    $region16: #{tpu_custom_call.1} parent=1 // pred_region
      _
    $region17: #{tpu_custom_call.1} parent=1 // pred_fallthru
      _
    // Predicated region
    $region18: #{tpu_custom_call.1} parent=1 // pred_check
      _
    $region19: #{tpu_custom_call.1} parent=1 // pred_check_branch
      %31 = sbr.rel (0) target = $region21
    $region20: #{tpu_custom_call.1} parent=1 // pred_region
      %32 = dma.done [#allocation3], 256
    $region21: #{tpu_custom_call.1} parent=1 // pred_fallthru
      _
    %v33 = vld [vmem:[#allocation2] sm:$0xff]
    %v34 = vld [vmem:[#allocation2 + $0x8] sm:$0xff]
    %v35 = vld [vmem:[%s2] sm:$0xff]
    %37 = vset.pattern.permute.xlu0 0
    %38 = vperm.xlu0 %37, %v35
    %v39 = vpop.permute.xlu0 %38
    %v41 = vmul.f32 %v33, %v39
    %v42 = vmul.f32 %v34, %v39
    %43 = vst [vmem:[#allocation5] sm:$0xff] %v41
    %44 = vst [vmem:[#allocation5 + $0x8] sm:$0xff] %v42
    %v45 = vld [vmem:[%s0] sm:$0xff]
    %v46 = vld [vmem:[%s0 + $0x8] sm:$0xff]
    %v47 = vld [vmem:[%s3] sm:$0xff]
    %49 = vset.pattern.permute.xlu0 0
    %50 = vperm.xlu0 %49, %v47
    %v51 = vpop.permute.xlu0 %50
    %v53 = vmul.f32 %v45, %v51
    %v54 = vmul.f32 %v46, %v51
    %55 = vst [vmem:[#allocation6] sm:$0xff] %v53
    %56 = vst [vmem:[#allocation6 + $0x8] sm:$0xff] %v54
    // Predicated region
    $region22: #{tpu_custom_call.1} parent=1 // pred_check
      _
    $region23: #{tpu_custom_call.1} parent=1 // pred_check_branch
      %58 = sbr.rel (0) target = $region25
    $region24: #{tpu_custom_call.1} parent=1 // pred_region
      %s60 = ssub.s32 256, 256
      %61 = vsyncadd [#allocation4], %s60
      %s63 = sshll.u32 [#allocation5], 4
      %s64 = int_to_ptr.vmem [resolvable:$true] %s63
      %66 = dma.vmem_to_hbm [thread:$0]  %s64, 256, %s4, [#allocation4]
    $region25: #{tpu_custom_call.1} parent=1 // pred_fallthru
      _
    // Predicated region
    $region26: #{tpu_custom_call.1} parent=1 // pred_check
      _
    $region27: #{tpu_custom_call.1} parent=1 // pred_check_branch
      %68 = sbr.rel (0) target = $region29
    $region28: #{tpu_custom_call.1} parent=1 // pred_region
      %s70 = ssub.s32 256, 256
      %71 = vsyncadd [#allocation7], %s70
      %s73 = sshll.u32 [#allocation6], 4
      %s74 = int_to_ptr.vmem [resolvable:$true] %s73
      %76 = dma.vmem_to_hbm [thread:$0]  %s74, 256, %s5, [#allocation7]
    $region29: #{tpu_custom_call.1} parent=1 // pred_fallthru
      _
    // Predicated region
    $region30: #{tpu_custom_call.1} parent=1 // pred_check
      _
    $region31: #{tpu_custom_call.1} parent=1 // pred_check_branch
      %78 = sbr.rel (0) target = $region33
    $region32: #{tpu_custom_call.1} parent=1 // pred_region
      %79 = dma.done [#allocation4], 256
    $region33: #{tpu_custom_call.1} parent=1 // pred_fallthru
      _
    // Predicated region
    $region34: #{tpu_custom_call.1} parent=1 // pred_check
      _
    $region35: #{tpu_custom_call.1} parent=1 // pred_check_branch
      %81 = sbr.rel (0) target = $region37
    $region36: #{tpu_custom_call.1} parent=1 // pred_region
      %82 = dma.done [#allocation7], 256
    $region37: #{tpu_custom_call.1} parent=1 // pred_fallthru
      _
    %83 = vsyncpa [#allocation3], 1
    %84 = vsyncpa [#allocation4], 1
    %85 = vsyncpa [#allocation7], 1

</llo_original>
